<compile_context>
chip_gen: v5e
topology: v5e:2x2
jax: 0.10.0
libtpu: 0.0.40
codegen_flags: <defaults>
</compile_context>

<pallas_src>
import functools
import math

import jax
import jax.numpy as jnp
from jax import lax
from jax.experimental import pallas as pl
from jax.experimental.pallas import tpu as pltpu


def _round_up(a: int, b: int) -> int:
    return ((a + b - 1) // b) * b


@functools.lru_cache(maxsize=1)
def _vmem_limit_bytes() -> int:
    """Generation-gated scoped-VMEM budget (never the whole physical VMEM)."""
    try:
        cap = int(pltpu.get_tpu_info().vmem_capacity_bytes)
    except Exception:
        cap = 64 << 20  # conservative fallback = v7x per-TensorCore capacity
    # 3/4 of physical leaves headroom for Mosaic internal scratch / semaphores:
    # v5e/v6e (128 MiB) -> 96 MiB, v7x (64 MiB) -> 48 MiB.
    return min(96 << 20, (cap * 3) // 4)


# ----------------------------- kernels ---------------------------------------

def _linear_kernel_single_step(x_ref, w_ref, o_ref):
    # Whole K fits in one tile: single MXU pass, write the output block directly.
    o_ref[...] = jnp.dot(
        x_ref[...], w_ref[...], preferred_element_type=jnp.float32
    ).astype(o_ref.dtype)


def _linear_kernel_acc_in_out(x_ref, w_ref, o_ref):
    # Multi-step K reduction, f32 output: accumulate directly into the
    # VMEM-resident output block (no scratch, no final copy).
    @pl.when(pl.program_id(2) == 0)
    def _():
        o_ref[...] = jnp.zeros_like(o_ref)

    o_ref[...] += jnp.dot(x_ref[...], w_ref[...], preferred_element_type=jnp.float32)


def _linear_kernel_scratch_acc(x_ref, w_ref, o_ref, acc_ref):
    # Multi-step K reduction, low-precision output: keep an f32 accumulator.
    @pl.when(pl.program_id(2) == 0)
    def _():
        acc_ref[...] = jnp.zeros_like(acc_ref)

    acc_ref[...] += jnp.dot(x_ref[...], w_ref[...], preferred_element_type=jnp.float32)

    @pl.when(pl.program_id(2) == pl.num_programs(2) - 1)
    def _():
        o_ref[...] = acc_ref[...].astype(o_ref.dtype)


# ----------------------------- wrapper ---------------------------------------

@functools.partial(jax.jit, static_argnames=("tm_max", "tn_max", "tk_max"))
def my_linear(x, w_kn, *, tm_max=512, tn_max=512, tk_max=1024):
    """y = x @ W.T, with the weight already re-laid-out K-major.

    x:    [..., in_features]
    w_kn: [in_features, out_features]   (== weight.T, done once at init)
    returns [..., out_features]
    """
    *lead, k = x.shape
    k_w, n = w_kn.shape
    assert k == k_w, "in_features mismatch"

    m = int(math.prod(lead)) if lead else 1
    out_dtype = x.dtype
    is_f32_out = jnp.dtype(out_dtype) == jnp.dtype(jnp.float32)

    in_bytes = jnp.dtype(x.dtype).itemsize
    w_bytes = jnp.dtype(w_kn.dtype).itemsize
    out_bytes = jnp.dtype(out_dtype).itemsize

    # --- tile selection (f32: sublane multiple 8, lane multiple 128) ----------
    tm = min(tm_max, _round_up(m, 8))
    tn = min(tn_max, _round_up(n, 128))

    k_al = _round_up(k, 128)
    # Collapse the K reduction to a single grid step when K is modest.
    tk = k_al if k_al <= 2048 else _round_up(tk_max, 128)

    # Safety: keep the double-buffered working set well inside the VMEM budget.
    vmem_limit = _vmem_limit_bytes()
    budget = (vmem_limit * 4) // 5
    while (2 * (tm * tk * in_bytes + tk * tn * w_bytes) + 2 * tm * tn * out_bytes) > budget and tk > 512:
        tk = max(512, _round_up(tk // 2, 128))

    m_p = _round_up(m, tm)
    n_p = _round_up(n, tn)
    k_p = _round_up(k, tk)

    # --- make sure there are >=2 'parallel' blocks (keeps both v7x TCs busy) --
    if (m_p // tm) * (n_p // tn) == 1:
        if m > 8:
            tm = _round_up(pl.cdiv(m, 2), 8)
            m_p = _round_up(m, tm)
        elif n > 128:
            tn = _round_up(pl.cdiv(n, 2), 128)
            n_p = _round_up(n, tn)

    grid_m = m_p // tm
    grid_n = n_p // tn
    grid_k = k_p // tk

    # --- conditional padding (skipped when shapes are already tile-aligned) ---
    x2d = x.reshape(m, k)
    if (m_p, k_p) != (m, k):
        x2d = jnp.pad(x2d, ((0, m_p - m), (0, k_p - k)))
    w2d = w_kn
    if (k_p, n_p) != (k, n):
        w2d = jnp.pad(w_kn, ((0, k_p - k), (0, n_p - n)))

    # --- kernel / grid variant -------------------------------------------------
    scratch_shapes = []
    if grid_k == 1:
        grid = (grid_m, grid_n)
        in_specs = [
            pl.BlockSpec((tm, tk), lambda i, j: (i, 0)),   # x tile  (M, K)
            pl.BlockSpec((tk, tn), lambda i, j: (0, j)),   # W tile  (K, N), K-major
        ]
        out_specs = pl.BlockSpec((tm, tn), lambda i, j: (i, j))
        dims = ("parallel", "parallel")
        kernel = _linear_kernel_single_step
    else:
        grid = (grid_m, grid_n, grid_k)
        in_specs = [
            pl.BlockSpec((tm, tk), lambda i, j, kk: (i, kk)),
            pl.BlockSpec((tk, tn), lambda i, j, kk: (kk, j)),
        ]
        out_specs = pl.BlockSpec((tm, tn), lambda i, j, kk: (i, j))
        dims = ("parallel", "parallel", "arbitrary")
        if is_f32_out:
            kernel = _linear_kernel_acc_in_out
        else:
            kernel = _linear_kernel_scratch_acc
            scratch_shapes = [pltpu.VMEM((tm, tn), jnp.float32)]

    cost = pl.CostEstimate(
        flops=2 * m_p * n_p * k_p,
        transcendentals=0,
        # account for the re-streaming of x (per N-block) and W (per M-block)
        bytes_accessed=in_bytes * m_p * k_p * grid_n
        + w_bytes * k_p * n_p * grid_m
        + out_bytes * m_p * n_p,
    )

    out2d = pl.pallas_call(
        kernel,
        out_shape=jax.ShapeDtypeStruct((m_p, n_p), out_dtype),
        grid_spec=pltpu.PrefetchScalarGridSpec(
            num_scalar_prefetch=0,
            grid=grid,
            in_specs=in_specs,
            out_specs=out_specs,
            scratch_shapes=scratch_shapes,
        ),
        compiler_params=pltpu.CompilerParams(
            dimension_semantics=dims,
            vmem_limit_bytes=vmem_limit,
        ),
        cost_estimate=cost,
    )(x2d, w2d)

    out2d = out2d[:m, :n]
    return out2d.reshape(*lead, n)


# ----------------------------- module port -----------------------------------

def xavier_uniform(key, out_features, in_features, dtype=jnp.float32):
    # Matches nn.init.xavier_uniform_ (gain=1): U(-a, a), a = sqrt(6 / (fan_in + fan_out))
    bound = math.sqrt(6.0 / (in_features + out_features))
    return jax.random.uniform(
        key, (out_features, in_features), dtype=dtype, minval=-bound, maxval=bound
    )


class MyLinearLayer:
    """JAX/Pallas port of the PyTorch module: forward(x) = F.linear(x, weight)."""

    def __init__(self, key, in_features, out_features, dtype=jnp.float32):
        self.in_features = in_features
        self.out_features = out_features
        # PyTorch-layout parameter (out_features, in_features), xavier-uniform init.
        self.weight = xavier_uniform(key, out_features, in_features, dtype)
        # One-time K-major re-layout (outside jit, amortised over all forwards)
        # so the kernel feeds the MXU in natural [tm,tk] x [tk,tn] order.
        self.w_kn = jnp.asarray(self.weight.T)

    def __call__(self, x):
        return my_linear(x, self.w_kn)


if __name__ == "__main__":
    key = jax.random.PRNGKey(0)
    k_x, k_w, k_x2, k_w2, k_x3, k_w3 = jax.random.split(key, 6)

    # Small shape consistent with the module: batch=2, seq=8, hidden 32 -> 64.
    batch, seq, in_features, out_features = 2, 8, 32, 64
    x = jax.random.normal(k_x, (batch, seq, in_features), dtype=jnp.float32)
    layer = MyLinearLayer(k_w, in_features, out_features)
    y = layer(x)
    jax.block_until_ready(y)
    y_ref = jnp.einsum("bsk,nk->bsn", x, layer.weight, precision=lax.Precision.HIGHEST)
    assert y.shape == (batch, seq, out_features)
    assert jnp.allclose(y, y_ref, atol=1e-5, rtol=1e-5)

    # Ragged shape: multiple parallel tiles + single collapsed-K step.
    m2, k2, n2 = 384, 640, 320
    x2 = jax.random.normal(k_x2, (m2, k2), dtype=jnp.float32)
    layer2 = MyLinearLayer(k_w2, k2, n2)
    y2 = layer2(x2)
    jax.block_until_ready(y2)
    y2_ref = jnp.dot(x2, layer2.weight.T, precision=lax.Precision.HIGHEST)
    assert jnp.allclose(y2, y2_ref, atol=1e-4, rtol=1e-4)

    # K > 2048: exercises the multi-step K reduction (accumulate-into-output) path.
    m3, k3, n3 = 256, 2304, 256
    x3 = jax.random.normal(k_x3, (m3, k3), dtype=jnp.float32)
    layer3 = MyLinearLayer(k_w3, k3, n3)
    y3 = layer3(x3)
    jax.block_until_ready(y3)
    y3_ref = jnp.dot(x3, layer3.weight.T, precision=lax.Precision.HIGHEST)
    assert jnp.allclose(y3, y3_ref, atol=2e-3, rtol=2e-3)

    print("KERNEL_OK")
</pallas_src>

<mosaic_0001>
module attributes {stable_mosaic.version = 11 : i64} {
  func.func @_linear_kernel_single_step(%arg0: i32, %arg1: i32, %arg2: memref<8x128xf32, #tpu.memory_space<vmem>>, %arg3: memref<128x128xf32, #tpu.memory_space<vmem>>, %arg4: memref<8x128xf32, #tpu.memory_space<vmem>>) attributes {dimension_semantics = [#tpu.dimension_semantics<parallel>, #tpu.dimension_semantics<parallel>], iteration_bounds = array<i64: 2, 1>, scalar_prefetch = 0 : i64, scratch_operands = 0 : i64, tpu.core_type = #tpu.core_type<tc>, window_params = [{transform_indices = @transform_0, window_bounds = array<i64: 8, 128>}, {transform_indices = @transform_1, window_bounds = array<i64: 128, 128>}, {transform_indices = @transform_2, window_bounds = array<i64: 8, 128>}]} {
    %c0 = arith.constant 0 : index
    %c0_0 = arith.constant 0 : index
    %0 = vector.load %arg2[%c0, %c0_0] : memref<8x128xf32, #tpu.memory_space<vmem>>, vector<8x128xf32>
    %c0_1 = arith.constant 0 : index
    %c0_2 = arith.constant 0 : index
    %1 = vector.load %arg3[%c0_1, %c0_2] : memref<128x128xf32, #tpu.memory_space<vmem>>, vector<128x128xf32>
    %cst = arith.constant dense<0.000000e+00> : vector<8x128xf32>
    %2 = tpu.matmul %0, %1, %cst {dimension_numbers = #tpu.dot_dimension_numbers<[1], [0], [0], [1], [0, 0, 1, 1], [], []>} : vector<8x128xf32>, vector<128x128xf32>, vector<8x128xf32> -> vector<8x128xf32>
    %c0_3 = arith.constant 0 : index
    %c0_4 = arith.constant 0 : index
    %3 = vector.load %arg4[%c0_3, %c0_4] : memref<8x128xf32, #tpu.memory_space<vmem>>, vector<8x128xf32>
    tpu.vector_store %arg4[%c0_3, %c0_4], %2 {strides = array<i32>} : memref<8x128xf32, #tpu.memory_space<vmem>>, vector<8x128xf32>,
    return
  }
  func.func @transform_0(%arg0: i32, %arg1: i32) -> (i32, i32) {
    %c0_i32 = arith.constant 0 : i32
    %c0_i32_0 = arith.constant 0 : i32
    return %arg0, %c0_i32 : i32, i32
  }
  func.func @transform_1(%arg0: i32, %arg1: i32) -> (i32, i32) {
    %c0_i32 = arith.constant 0 : i32
    %c0_i32_0 = arith.constant 0 : i32
    return %c0_i32, %arg1 : i32, i32
  }
  func.func @transform_2(%arg0: i32, %arg1: i32) -> (i32, i32) {
    %c0_i32 = arith.constant 0 : i32
    return %arg0, %arg1 : i32, i32
  }
}

</mosaic_0001>

<llo_original>
// kernel: my_linear.1
$region0: #{my_linear.1}
  #allocation0 [shape = 'u32[]', space=smem, size = 0x4, offset = 0x4, fixed_abs, tag = 'smem constant byte address 0x4 - core index']
  #allocation1 [shape = 'u32[72,128]{1,0:T(1,128)}', space=vmem, size = 0x9000, scoped, tag = 'internal scratch']
  %s0 = inlined_call_operand.vmem [shape: f32[16,128], index: 0, kind: input, shape index: {}]
  %s1 = inlined_call_operand.vmem [shape: f32[128,128], index: 1, kind: input, shape index: {}]
  %s2 = inlined_call_operand.vmem [shape: f32[16,128], index: 2, kind: output, shape index: {}]
  %s3 = sld [smem:[#allocation0]]
  $region41: #{my_linear.1} parent=0
    _
  %s5 = ssub.s32 1, %s3
  %s6 = scalar_select 0, %s5, %s3
  loop: start=0, step=1, limit=4
  $region2: #{my_linear.1} parent=0 // loop_pre_header
    _
  $region3: #{my_linear.1} parent=0 // loop_header
    %s8 = sphi 0, %s12
    %p9 = scmp.ge.s32.totalorder %s8, 4
    %s15 = sphi 0, %s27
    %s16 = sphi 0, %s23
    %s17 = sphi 0, %s15
    %s18 = sphi 0, %s16
    %s19 = sphi 0, %s17
    %s20 = sphi 0, %s18
    %s30 = sphi 0, %s32
    %s33 = sphi 0, %s30
    %s34 = sphi 0, %s33
    %s50 = sphi 0, %s34
    %s56 = sphi 0, %s58
    %s59 = sphi 0, %s56
    %s60 = sphi 0, %s59
    %s76 = sphi 0, %s60
    %s84 = sphi 0, %s86
    %s87 = sphi 0, %s84
    %s88 = sphi 0, %s87
    %s104 = sphi 0, %s88
  $region4: #{my_linear.1} parent=0 // loop_header_branch
    %11 = sbr.rel (%p9) target = $region8
  $region5: #{my_linear.1} parent=0 // loop_body
    %s13 = ssub.s32 %s8, 1
    %s14 = ssub.s32 %s8, 2
    %s21 = sadd.s32 1, %s16
    %p22 = scmp.ge.s32.totalorder %s21, 1
    %s23 = scalar_select %p22, 0, %s21
    %s24 = sadd.s32 1, %s15
    %s25 = scalar_select %p22, %s24, %s15
    %p26 = scmp.ge.s32.totalorder %s25, 2
    %s27 = scalar_select %p26, 0, %s25
    %s28 = ssub.s32 %s15, %s27
    %p29 = scmp.eq.s32.totalorder %s28, 0
    %s31 = sadd.s32 %s30, 1
    %s32 = scalar_select %p29, %s30, %s31
    %p35 = pneg %p29
    %p36 = scmp.eq.s32.totalorder %s8, 1
    %p37 = por %p35, %p36
    %p38 = scmp.ne.s32.totalorder %s30, %s33
    %p39 = scmp.eq.s32.totalorder %s8, 0
    %p40 = por %p38, %p39
    %p41 = scmp.ne.s32.totalorder %s30, %s33
    %p42 = scmp.eq.s32.totalorder %s13, 1
    %p43 = por %p41, %p42
    %p44 = scmp.ne.s32.totalorder %s33, %s34
    %p45 = scmp.eq.s32.totalorder %s13, 0
    %p46 = por %p44, %p45
    %p47 = scmp.ne.s32.totalorder %s33, %s34
    %p48 = scmp.eq.s32.totalorder %s14, 1
    %p49 = por %p47, %p48
    %p51 = scmp.ne.s32.totalorder %s34, %s50
    %p52 = scmp.eq.s32.totalorder %s14, 0
    %p53 = por %p51, %p52
    %s54 = ssub.s32 %s16, %s23
    %p55 = scmp.eq.s32.totalorder %s54, 0
    %s57 = sadd.s32 %s56, 1
    %s58 = scalar_select %p55, %s56, %s57
    %p61 = pneg %p55
    %p62 = scmp.eq.s32.totalorder %s8, 1
    %p63 = por %p61, %p62
    %p64 = scmp.ne.s32.totalorder %s56, %s59
    %p65 = scmp.eq.s32.totalorder %s8, 0
    %p66 = por %p64, %p65
    %p67 = scmp.ne.s32.totalorder %s56, %s59
    %p68 = scmp.eq.s32.totalorder %s13, 1
    %p69 = por %p67, %p68
    %p70 = scmp.ne.s32.totalorder %s59, %s60
    %p71 = scmp.eq.s32.totalorder %s13, 0
    %p72 = por %p70, %p71
    %p73 = scmp.ne.s32.totalorder %s59, %s60
    %p74 = scmp.eq.s32.totalorder %s14, 1
    %p75 = por %p73, %p74
    %p77 = scmp.ne.s32.totalorder %s60, %s76
    %p78 = scmp.eq.s32.totalorder %s14, 0
    %p79 = por %p77, %p78
    %s80 = ssub.s32 %s15, %s27
    %s81 = ssub.s32 %s16, %s23
    %s82 = sor.u32 %s80, %s81
    %p83 = scmp.eq.s32.totalorder %s82, 0
    %s85 = sadd.s32 %s84, 1
    %s86 = scalar_select %p83, %s84, %s85
    %p89 = pneg %p83
    %p90 = scmp.eq.s32.totalorder %s8, 1
    %p91 = por %p89, %p90
    %p92 = scmp.ne.s32.totalorder %s84, %s87
    %p93 = scmp.eq.s32.totalorder %s8, 0
    %p94 = por %p92, %p93
    %p95 = scmp.ne.s32.totalorder %s84, %s87
    %p96 = scmp.eq.s32.totalorder %s13, 1
    %p97 = por %p95, %p96
    %p98 = scmp.ne.s32.totalorder %s87, %s88
    %p99 = scmp.eq.s32.totalorder %s13, 0
    %p100 = por %p98, %p99
    %p101 = scmp.ne.s32.totalorder %s87, %s88
    %p102 = scmp.eq.s32.totalorder %s14, 1
    %p103 = por %p101, %p102
    %p105 = scmp.ne.s32.totalorder %s88, %s104
    %p106 = scmp.eq.s32.totalorder %s14, 0
    %p107 = por %p105, %p106
    %p108 = scmp.le.s32.totalorder 1, %s8
    %p109 = scmp.lt.s32.totalorder %s8, 3
    %p110 = pnand %p108, %p109
    %p111 = pneg %p110
    // Predicated region
    $region9: #{my_linear.1} parent=5 // pred_check
      _
    $region10: #{my_linear.1} parent=5 // pred_check_branch
      %113 = sbr.rel (%p110) target = $region12
    $region11: #{my_linear.1} parent=5 // pred_region
      %s114 = ssub.s32 %s8, 1
      // Predicated region
      $region13: #{my_linear.1} parent=11 // pred_check
        %p115 = pneg %p72
      $region14: #{my_linear.1} parent=11 // pred_check_branch
        %117 = sbr.rel (%p115) target = $region16
      $region15: #{my_linear.1} parent=11 // pred_region
        %p118 = scmp.lt.s32.totalorder %s18, 0
        %s119 = scalar_select %p118, %s18, 0
        %s120 = smul.addr %s119, 8
        %s121 = scalar_lea.vmem %s1, %s120
      $region16: #{my_linear.1} parent=11 // pred_fallthru
        _
    $region12: #{my_linear.1} parent=5 // pred_fallthru
      _
    %p122 = scmp.lt.s32.totalorder %s8, 2
    // Predicated region
    $region17: #{my_linear.1} parent=5 // pred_check
      %p123 = pneg %p122
    $region18: #{my_linear.1} parent=5 // pred_check_branch
      %125 = sbr.rel (%p123) target = $region20
    $region19: #{my_linear.1} parent=5 // pred_region
      // Predicated region
      $region21: #{my_linear.1} parent=19 // pred_check
        %p126 = pneg %p40
      $region22: #{my_linear.1} parent=19 // pred_check_branch
        %128 = sbr.rel (%p126) target = $region24
      $region23: #{my_linear.1} parent=19 // pred_region
        %p129 = scmp.lt.s32.totalorder %s15, 1
        %s130 = scalar_select %p129, %s15, 1
        %s131 = smul.addr %s130, 8
        %s132 = scalar_lea.vmem %s0, %s131
      $region24: #{my_linear.1} parent=19 // pred_fallthru
        _
    $region20: #{my_linear.1} parent=5 // pred_fallthru
      _
    %p133 = scmp.le.s32.totalorder 1, %s8
    %p134 = scmp.lt.s32.totalorder %s8, 3
    %p135 = pnand %p133, %p134
    %p136 = pneg %p135
    // Predicated region
    $region25: #{my_linear.1} parent=5 // pred_check
      _
    $region26: #{my_linear.1} parent=5 // pred_check_branch
      %138 = sbr.rel (%p135) target = $region28
    $region27: #{my_linear.1} parent=5 // pred_region
      %s139 = ssub.s32 %s8, 1
      %p140 = scmp.lt.s32.totalorder %s17, 1
      %s141 = scalar_select %p140, %s17, 1
      %s142 = smul.addr %s141, 8
      %s143 = scalar_lea.vmem %s0, %s142
      %p144 = pneg %p46
      %p145 = pneg %p43
      %p146 = scmp.lt.s32.totalorder %s18, 0
      %s147 = scalar_select %p146, %s18, 0
      %s148 = smul.addr %s147, 8
      %s149 = scalar_lea.vmem %s1, %s148
      %p150 = pneg %p72
      %p151 = pneg %p69
      %p152 = pneg %p100
      %p153 = pneg %p97
      %p154 = scmp.lt.s32.totalorder %s17, 1
      %s155 = scalar_select %p154, %s17, 1
      %p156 = scmp.lt.s32.totalorder %s18, 0
      %s157 = scalar_select %p156, %s18, 0
      %s158 = sadd.s32 %s157, %s155
      %s159 = smul.addr %s158, 8
      %s160 = scalar_lea.vmem %s2, %s159
      %p161 = scmp.lt.s32.totalorder %s17, 1
      %s162 = scalar_select %p161, %s17, 1
      %s163 = smul.addr %s162, 8
      %s164 = scalar_lea.vmem %s0, %s163
      %p165 = scmp.lt.s32.totalorder %s18, 0
      %s166 = scalar_select %p165, %s18, 0
      %s167 = smul.addr %s166, 8
      %s168 = scalar_lea.vmem %s1, %s167
      %p169 = scmp.lt.s32.totalorder %s17, 1
      %s170 = scalar_select %p169, %s17, 1
      %p171 = scmp.lt.s32.totalorder %s18, 0
      %s172 = scalar_select %p171, %s18, 0
      %s173 = sadd.s32 %s172, %s170
      %s174 = smul.addr %s173, 8
      %s175 = scalar_lea.vmem %s2, %s174
      %v176 = vld [vmem:[%s164] sm:$0xff]
      %v177 = vld [vmem:[%s168] sm:$0xff]
      %v178 = vld [vmem:[%s168 + $0x8] sm:$0xff]
      %v179 = vld [vmem:[%s168 + $0x10] sm:$0xff]
      %v180 = vld [vmem:[%s168 + $0x18] sm:$0xff]
      %v181 = vld [vmem:[%s168 + $0x20] sm:$0xff]
      %v182 = vld [vmem:[%s168 + $0x28] sm:$0xff]
      %v183 = vld [vmem:[%s168 + $0x30] sm:$0xff]
      %v184 = vld [vmem:[%s168 + $0x38] sm:$0xff]
      %v185 = vld [vmem:[%s168 + $0x40] sm:$0xff]
      %v186 = vld [vmem:[%s168 + $0x48] sm:$0xff]
      %v187 = vld [vmem:[%s168 + $0x50] sm:$0xff]
      %v188 = vld [vmem:[%s168 + $0x58] sm:$0xff]
      %v189 = vld [vmem:[%s168 + $0x60] sm:$0xff]
      %v190 = vld [vmem:[%s168 + $0x68] sm:$0xff]
      %v191 = vld [vmem:[%s168 + $0x70] sm:$0xff]
      %v192 = vld [vmem:[%s168 + $0x78] sm:$0xff]
      %193 = vmatpush.msra.mxu0 %v192
      %194 = vmatpush.msra.mxu0 %v191
      %195 = vmatpush.msra.mxu0 %v190
      %196 = vmatpush.msra.mxu0 %v189
      %197 = vmatpush.msra.mxu0 %v188
      %198 = vmatpush.msra.mxu0 %v187
      %199 = vmatpush.msra.mxu0 %v186
      %200 = vmatpush.msra.mxu0 %v185
      %201 = vmatpush.msra.mxu0 %v184
      %202 = vmatpush.msra.mxu0 %v183
      %203 = vmatpush.msra.mxu0 %v182
      %204 = vmatpush.msra.mxu0 %v181
      %205 = vmatpush.msra.mxu0 %v180
      %206 = vmatpush.msra.mxu0 %v179
      %207 = vmatpush.msra.mxu0 %v178
      %208 = vmatpush.msra.mxu0 %v177
      %209 = vmatmul.f32.gmra.mxu0 %v176
      %v210 = vpop.f32.mrf.mxu0
      %v211 = vadd.f32 0.0, %v210
      %212 = vdwg.mxu0
      %213 = vst [vmem:[%s175] sm:$0xff] %v211
      %p214 = scmp.lt.s32.totalorder %s17, 1
      %s215 = scalar_select %p214, %s17, 1
      %p216 = scmp.lt.s32.totalorder %s18, 0
      %s217 = scalar_select %p216, %s18, 0
      %s218 = sadd.s32 %s217, %s215
      %s219 = smul.addr %s218, 8
      %s220 = scalar_lea.vmem %s2, %s219
      // Predicated region
      $region29: #{my_linear.1} parent=27 // pred_check
        %p221 = pneg %p97
      $region30: #{my_linear.1} parent=27 // pred_check_branch
        %223 = sbr.rel (%p221) target = $region32
      $region31: #{my_linear.1} parent=27 // pred_region
        _
      $region32: #{my_linear.1} parent=27 // pred_fallthru
        _
    $region28: #{my_linear.1} parent=5 // pred_fallthru
      _
    %p224 = scmp.le.s32.totalorder 2, %s8
    // Predicated region
    $region33: #{my_linear.1} parent=5 // pred_check
      %p225 = pneg %p224
    $region34: #{my_linear.1} parent=5 // pred_check_branch
      %227 = sbr.rel (%p225) target = $region36
    $region35: #{my_linear.1} parent=5 // pred_region
      %s228 = ssub.s32 %s8, 2
      // Predicated region
      $region37: #{my_linear.1} parent=35 // pred_check
        %p229 = pneg %p103
      $region38: #{my_linear.1} parent=35 // pred_check_branch
        %231 = sbr.rel (%p229) target = $region40
      $region39: #{my_linear.1} parent=35 // pred_region
        %p232 = scmp.lt.s32.totalorder %s19, 1
        %s233 = scalar_select %p232, %s19, 1
        %p234 = scmp.lt.s32.totalorder %s20, 0
        %s235 = scalar_select %p234, %s20, 0
        %s236 = sadd.s32 %s235, %s233
        %s237 = smul.addr %s236, 8
        %s238 = scalar_lea.vmem %s2, %s237
      $region40: #{my_linear.1} parent=35 // pred_fallthru
        _
    $region36: #{my_linear.1} parent=5 // pred_fallthru
      _
  $region6: #{my_linear.1} parent=0 // loop_footer
    %s12 = sadd.s32 1, %s8
  $region7: #{my_linear.1} parent=0 // loop_footer_branch
    %7 = sbr.rel target = $region3
  $region8: #{my_linear.1} parent=0 // loop_exit
    _

</llo_original>
